<compile_context>
chip_gen: v6e
topology: v6e:2x2x1
jax: 0.10.0
libtpu: 0.0.40
codegen_flags: <defaults>
</compile_context>

<pallas_src>
import jax
import jax.numpy as jnp
from jax.experimental import pallas as pl
from jax.experimental.pallas import tpu as pltpu


def _vmem_budgets():
    """(input_stream_budget_bytes, vmem_limit_bytes) tuned per chip generation."""
    try:
        phys = int(pltpu.get_tpu_info().vmem_capacity_bytes)
    except Exception:
        phys = 64 * 1024 * 1024  # conservative: v7x per-TC VMEM
    # v5e/v6e (128 MiB): limit 64 MiB, budget 24 MiB.  v7x (64 MiB): 32 / 16.
    vmem_limit = int(min(max(32 << 20, phys // 2), 64 << 20))
    input_budget = int(min(24 << 20, phys // 4))
    return input_budget, vmem_limit


def _choose_spatial_tile(hw, bytes_per_col, budget_bytes, max_tile=None):
    """Pick the spatial tile width (multiple of 128, or the full HW)."""
    cap = budget_bytes // max(bytes_per_col, 1)
    if max_tile is not None:
        cap = min(cap, int(max_tile))
    cap = min(max(cap, 128), 32768)
    cap = (cap // 128) * 128
    if hw <= cap:
        return hw  # single full-width block (block == full dim, no mask)
    # Prefer a 128-multiple tile that divides hw exactly (no mask needed).
    for t in range(cap, 127, -128):
        if hw % t == 0:
            return t
    return cap  # cdiv grid + in-kernel mask on the last partial block


def _make_dice_stats_kernel(c, tile, hw, tiles_per_chunk, labels_mode, needs_mask):
    def kernel(x_ref, t_ref, stats_ref, inter_acc, sump_acc, sumt_acc):
        h = pl.program_id(2)

        @pl.when(h == 0)
        def _init():
            inter_acc[...] = jnp.zeros_like(inter_acc)
            sump_acc[...] = jnp.zeros_like(sump_acc)
            sumt_acc[...] = jnp.zeros_like(sumt_acc)

        x = x_ref[0].astype(jnp.float32)  # (C, tile) — upcast once in VMEM

        if needs_mask:
            s = pl.program_id(1)
            col = (s * tiles_per_chunk + h) * tile + jax.lax.broadcasted_iota(
                jnp.int32, (1, tile), 1)          # (1, tile)
            valid = col < hw                      # (1, tile) bool
            # Mask garbage OOB logits BEFORE exp so NaN/Inf cannot propagate
            # through the shared softmax denominator.
            x = jnp.where(valid, x, 0.0)

        # Softmax over the channel (sublane) axis == torch.softmax(dim=1).
        m = jnp.max(x, axis=0, keepdims=True)          # (1, tile)
        e = jnp.exp(x - m)                             # (C, tile)
        denom = jnp.sum(e, axis=0, keepdims=True)      # (1, tile)
        inv = pl.reciprocal(denom, approx=False)       # exact: keep 1e-5 match
        p = e * inv                                    # (C, tile)
        if needs_mask:
            p = jnp.where(valid, p, 0.0)

        if labels_mode:
            lbl = t_ref[0]                              # (1, tile) int32 labels
            cls = jax.lax.broadcasted_iota(jnp.int32, (c, tile), 0)
            onehot = lbl == cls                         # (C, tile) bool
            if needs_mask:
                onehot = jnp.logical_and(onehot, valid)
            t = onehot.astype(jnp.float32)
        else:
            t = t_ref[0].astype(jnp.float32)            # (C, tile) one-hot
            if needs_mask:
                t = jnp.where(valid, t, 0.0)

        # Pure accumulation into tiny VMEM scratch; no per-step output store.
        inter_acc[...] += jnp.sum(p * t, axis=1, keepdims=True)  # (C, 1)
        sump_acc[...] += jnp.sum(p, axis=1, keepdims=True)       # (C, 1)
        sumt_acc[...] += jnp.sum(t, axis=1, keepdims=True)       # (C, 1)

        @pl.when(h == pl.num_programs(2) - 1)
        def _finalize():
            stats = jnp.concatenate(
                [inter_acc[...], sump_acc[...], sumt_acc[...]], axis=1)  # (C, 3)
            stats_ref[...] = stats[None, None]

    return kernel


def dice_loss(inputs, targets, num_classes, smooth=1e-6, max_spatial_tile=None):
    """Soft Dice loss matching the PyTorch DiceLoss.forward.

    inputs : (N, C, H, W) logits.
    targets: either (N, H, W) integer class labels (fast path — one-hot is
             built in-VMEM) or (N, C, H, W) one-hot targets (module-faithful).
    """
    N, C, H, W = inputs.shape
    assert C == num_classes
    HW = H * W

    x = inputs.reshape(N, C, HW)  # contiguous merge, no copy / no dtype cast

    labels_mode = targets.ndim == 3
    if labels_mode:
        assert targets.shape == (N, H, W)
        t = targets.reshape(N, 1, HW).astype(jnp.int32)
        t_bytes_per_col = 4
    else:
        assert targets.shape == (N, C, H, W)
        t = targets.reshape(N, C, HW)
        t_bytes_per_col = C * targets.dtype.itemsize

    input_budget, vmem_limit = _vmem_budgets()
    bytes_per_col = 2 * C * x.dtype.itemsize + 2 * t_bytes_per_col  # 2x: dbl-buffer
    tile = _choose_spatial_tile(HW, bytes_per_col, input_budget, max_spatial_tile)
    num_tiles = pl.cdiv(HW, tile)
    needs_mask = (num_tiles * tile) != HW

    # v7x: guarantee >=2 iterations on a parallel axis when N == 1 by splitting
    # the spatial range into S parallel super-chunks (no-op on v5e/v6e).
    if N == 1 and num_tiles >= 2 and num_tiles % 2 == 0:
        S = 2
    else:
        S = 1
    T = num_tiles // S

    kernel = _make_dice_stats_kernel(C, tile, HW, T, labels_mode, needs_mask)
    t_block = (1, 1, tile) if labels_mode else (1, C, tile)

    stats = pl.pallas_call(
        kernel,
        out_shape=jax.ShapeDtypeStruct((N, S, C, 3), jnp.float32),
        grid_spec=pltpu.PrefetchScalarGridSpec(
            num_scalar_prefetch=0,
            grid=(N, S, T),  # batch / spatial-chunk parallel, reduction last
            in_specs=[
                pl.BlockSpec((1, C, tile), lambda n, s, h: (n, 0, s * T + h)),
                pl.BlockSpec(t_block, lambda n, s, h: (n, 0, s * T + h)),
            ],
            out_specs=pl.BlockSpec((1, 1, C, 3), lambda n, s, h: (n, s, 0, 0)),
            scratch_shapes=[
                pltpu.VMEM((C, 1), jnp.float32),  # intersection accumulator
                pltpu.VMEM((C, 1), jnp.float32),  # sum(p) accumulator
                pltpu.VMEM((C, 1), jnp.float32),  # sum(t) accumulator
            ],
        ),
        compiler_params=pltpu.CompilerParams(
            dimension_semantics=("parallel", "parallel", "arbitrary"),
            vmem_limit_bytes=vmem_limit,
        ),
    )(x, t)

    # Tiny epilogue in plain JAX: fold per-(batch, chunk) partials, per-class
    # dice, presence-masked mean (matches the PyTorch loop semantics).
    totals = jnp.sum(stats, axis=(0, 1))  # (C, 3)
    inter, sum_p, sum_t = totals[:, 0], totals[:, 1], totals[:, 2]

    dice = (2.0 * inter + smooth) / (sum_p + sum_t + smooth)
    present = sum_t > 0.0
    per_class_loss = jnp.where(present, 1.0 - dice, 0.0)
    num_present = jnp.sum(present.astype(jnp.float32))
    loss = jnp.where(num_present > 0, jnp.sum(per_class_loss) / num_present, 0.0)
    return loss.astype(jnp.float32)


def _reference_dice_loss(inputs, targets_onehot, num_classes, smooth=1e-6):
    # Pure-JAX reference mirroring the PyTorch forward loop.
    p = jax.nn.softmax(inputs.astype(jnp.float32), axis=1)
    t = targets_onehot.astype(jnp.float32)
    loss = 0.0
    n_present = 0
    for i in range(num_classes):
        pi = p[:, i, :, :]
        ti = t[:, i, :, :]
        inter = jnp.sum(pi * ti)
        union = jnp.sum(pi) + jnp.sum(ti)
        dice = (2.0 * inter + smooth) / (union + smooth)
        if float(jnp.sum(ti)) > 0:
            loss = loss + (1.0 - dice)
            n_present += 1
    if n_present > 0:
        return loss / n_present
    return jnp.array(0.0, jnp.float32)


if __name__ == "__main__":
    key = jax.random.PRNGKey(0)
    C = 4

    def make_case(k, n, h, w):
        k_logits, k_labels = jax.random.split(k)
        logits = jax.random.normal(k_logits, (n, C, h, w), dtype=jnp.float32)
        labels = jax.random.randint(k_labels, (n, h, w), 0, C, dtype=jnp.int32)
        onehot = jax.nn.one_hot(labels, C, axis=1, dtype=jnp.float32)
        return logits, labels, onehot

    k0, k1, k2 = jax.random.split(key, 3)

    # Case 1: N=2, 16x16, integer-label fast path, single full-width tile.
    logits, labels, onehot = make_case(k0, 2, 16, 16)
    ref = _reference_dice_loss(logits, onehot, C)
    loss = dice_loss(logits, labels, C)
    jax.block_until_ready(loss)
    assert abs(float(loss) - float(ref)) < 1e-5, (float(loss), float(ref))

    # Case 2: one-hot target path (module-faithful signature).
    loss2 = dice_loss(logits, onehot, C)
    jax.block_until_ready(loss2)
    assert abs(float(loss2) - float(ref)) < 1e-5, (float(loss2), float(ref))

    # Case 3: multi-tile spatial accumulation (tile=128, HW=256 divisible).
    loss3 = dice_loss(logits, labels, C, max_spatial_tile=128)
    jax.block_until_ready(loss3)
    assert abs(float(loss3) - float(ref)) < 1e-5, (float(loss3), float(ref))

    # Case 4: HW not divisible by tile (16x18=288) -> cdiv grid + in-kernel
    # mask, no wrapper-level padding copy. Both target paths.
    logits4, labels4, onehot4 = make_case(k1, 2, 16, 18)
    ref4 = _reference_dice_loss(logits4, onehot4, C)
    loss4a = dice_loss(logits4, labels4, C, max_spatial_tile=128)
    loss4b = dice_loss(logits4, onehot4, C, max_spatial_tile=128)
    jax.block_until_ready(loss4b)
    assert abs(float(loss4a) - float(ref4)) < 1e-5, (float(loss4a), float(ref4))
    assert abs(float(loss4b) - float(ref4)) < 1e-5, (float(loss4b), float(ref4))

    # Case 5: N=1 -> spatial super-chunk parallel axis (keeps both v7x TCs busy).
    logits5, labels5, onehot5 = make_case(k2, 1, 16, 16)
    ref5 = _reference_dice_loss(logits5, onehot5, C)
    loss5 = dice_loss(logits5, labels5, C, max_spatial_tile=128)
    jax.block_until_ready(loss5)
    assert abs(float(loss5) - float(ref5)) < 1e-5, (float(loss5), float(ref5))

    print("KERNEL_OK")
</pallas_src>

<mosaic_0001>
module attributes {stable_mosaic.version = 11 : i64} {
  func.func @kernel(%arg0: i32, %arg1: i32, %arg2: i32, %arg3: memref<1x4x256xf32, #tpu.memory_space<vmem>>, %arg4: memref<1x1x256xi32, #tpu.memory_space<vmem>>, %arg5: memref<1x1x4x3xf32, #tpu.memory_space<vmem>>, %arg6: memref<4x1xf32, #tpu.memory_space<vmem>>, %arg7: memref<4x1xf32, #tpu.memory_space<vmem>>, %arg8: memref<4x1xf32, #tpu.memory_space<vmem>>) attributes {dimension_semantics = [#tpu.dimension_semantics<parallel>, #tpu.dimension_semantics<parallel>, #tpu.dimension_semantics<arbitrary>], iteration_bounds = array<i64: 2, 1, 1>, scalar_prefetch = 0 : i64, scratch_operands = 3 : i64, tpu.core_type = #tpu.core_type<tc>, window_params = [{transform_indices = @transform_0, window_bounds = array<i64: 1, 4, 256>}, {transform_indices = @transform_1, window_bounds = array<i64: 1, 1, 256>}, {transform_indices = @transform_2, window_bounds = array<i64: 1, 1, 4, 3>}]} {
    %c0_i32 = arith.constant 0 : i32
    %0 = arith.cmpi eq, %arg2, %c0_i32 : i32
    %1 = arith.extui %0 : i1 to i32
    %c0_i32_0 = arith.constant 0 : i32
    %2 = arith.cmpi ne, %1, %c0_i32_0 : i32
    scf.if %2 {
      %cst_24 = arith.constant 0.000000e+00 : f32
      %41 = vector.broadcast %cst_24 : f32 to vector<4x1xf32>
      %c0_25 = arith.constant 0 : index
      %c0_26 = arith.constant 0 : index
      %42 = vector.load %arg6[%c0_25, %c0_26] : memref<4x1xf32, #tpu.memory_space<vmem>>, vector<4x1xf32>
      tpu.vector_store %arg6[%c0_25, %c0_26], %41 {strides = array<i32>} : memref<4x1xf32, #tpu.memory_space<vmem>>, vector<4x1xf32>,
      %cst_27 = arith.constant 0.000000e+00 : f32
      %43 = vector.broadcast %cst_27 : f32 to vector<4x1xf32>
      %c0_28 = arith.constant 0 : index
      %c0_29 = arith.constant 0 : index
      %44 = vector.load %arg7[%c0_28, %c0_29] : memref<4x1xf32, #tpu.memory_space<vmem>>, vector<4x1xf32>
      tpu.vector_store %arg7[%c0_28, %c0_29], %43 {strides = array<i32>} : memref<4x1xf32, #tpu.memory_space<vmem>>, vector<4x1xf32>,
      %cst_30 = arith.constant 0.000000e+00 : f32
      %45 = vector.broadcast %cst_30 : f32 to vector<4x1xf32>
      %c0_31 = arith.constant 0 : index
      %c0_32 = arith.constant 0 : index
      %46 = vector.load %arg8[%c0_31, %c0_32] : memref<4x1xf32, #tpu.memory_space<vmem>>, vector<4x1xf32>
      tpu.vector_store %arg8[%c0_31, %c0_32], %45 {strides = array<i32>} : memref<4x1xf32, #tpu.memory_space<vmem>>, vector<4x1xf32>,
    } else {
    }
    %c0 = arith.constant 0 : index
    %c0_1 = arith.constant 0 : index
    %c0_2 = arith.constant 0 : index
    %3 = vector.load %arg3[%c0, %c0_1, %c0_2] : memref<1x4x256xf32, #tpu.memory_space<vmem>>, vector<1x4x256xf32>
    %4 = vector.shape_cast %3 : vector<1x4x256xf32> to vector<4x256xf32>
    %cst = arith.constant dense<0xFF800000> : vector<256xf32>
    %5 = vector.multi_reduction <maximumf>, %4, %cst [0] : vector<4x256xf32> to vector<256xf32>
    %6 = vector.shape_cast %5 : vector<256xf32> to vector<1x256xf32>
    %7 = vector.broadcast %6 : vector<1x256xf32> to vector<4x256xf32>
    %8 = arith.subf %4, %7 : vector<4x256xf32>
    %9 = math.exp %8 : vector<4x256xf32>
    %cst_3 = arith.constant dense<0.000000e+00> : vector<256xf32>
    %10 = vector.multi_reduction <add>, %9, %cst_3 [0] : vector<4x256xf32> to vector<256xf32>
    %11 = vector.shape_cast %10 : vector<256xf32> to vector<1x256xf32>
    %12 = tpu.reciprocal %11 : vector<1x256xf32> -> vector<1x256xf32>
    %13 = vector.broadcast %12 : vector<1x256xf32> to vector<4x256xf32>
    %14 = arith.mulf %9, %13 : vector<4x256xf32>
    %c0_4 = arith.constant 0 : index
    %c0_5 = arith.constant 0 : index
    %c0_6 = arith.constant 0 : index
    %15 = vector.load %arg4[%c0_4, %c0_5, %c0_6] : memref<1x1x256xi32, #tpu.memory_space<vmem>>, vector<1x1x256xi32>
    %16 = vector.shape_cast %15 : vector<1x1x256xi32> to vector<1x256xi32>
    %17 = tpu.iota {dimensions = array<i32: 0>} : vector<4x256xi32>
    %18 = vector.broadcast %16 : vector<1x256xi32> to vector<4x256xi32>
    %19 = arith.cmpi eq, %18, %17 : vector<4x256xi32>
    %20 = arith.extui %19 : vector<4x256xi1> to vector<4x256xi32>
    %21 = arith.sitofp %20 : vector<4x256xi32> to vector<4x256xf32>
    %c0_7 = arith.constant 0 : index
    %c0_8 = arith.constant 0 : index
    %22 = vector.load %arg6[%c0_7, %c0_8] : memref<4x1xf32, #tpu.memory_space<vmem>>, vector<4x1xf32>
    %23 = arith.mulf %14, %21 : vector<4x256xf32>
    %cst_9 = arith.constant dense<0.000000e+00> : vector<4xf32>
    %24 = vector.multi_reduction <add>, %23, %cst_9 [1] : vector<4x256xf32> to vector<4xf32>
    %25 = vector.shape_cast %24 : vector<4xf32> to vector<4x1xf32>
    %26 = arith.addf %22, %25 : vector<4x1xf32>
    %c0_10 = arith.constant 0 : index
    %c0_11 = arith.constant 0 : index
    %27 = vector.load %arg6[%c0_10, %c0_11] : memref<4x1xf32, #tpu.memory_space<vmem>>, vector<4x1xf32>
    tpu.vector_store %arg6[%c0_10, %c0_11], %26 {strides = array<i32>} : memref<4x1xf32, #tpu.memory_space<vmem>>, vector<4x1xf32>,
    %c0_12 = arith.constant 0 : index
    %c0_13 = arith.constant 0 : index
    %28 = vector.load %arg7[%c0_12, %c0_13] : memref<4x1xf32, #tpu.memory_space<vmem>>, vector<4x1xf32>
    %cst_14 = arith.constant dense<0.000000e+00> : vector<4xf32>
    %29 = vector.multi_reduction <add>, %14, %cst_14 [1] : vector<4x256xf32> to vector<4xf32>
    %30 = vector.shape_cast %29 : vector<4xf32> to vector<4x1xf32>
    %31 = arith.addf %28, %30 : vector<4x1xf32>
    %c0_15 = arith.constant 0 : index
    %c0_16 = arith.constant 0 : index
    %32 = vector.load %arg7[%c0_15, %c0_16] : memref<4x1xf32, #tpu.memory_space<vmem>>, vector<4x1xf32>
    tpu.vector_store %arg7[%c0_15, %c0_16], %31 {strides = array<i32>} : memref<4x1xf32, #tpu.memory_space<vmem>>, vector<4x1xf32>,
    %c0_17 = arith.constant 0 : index
    %c0_18 = arith.constant 0 : index
    %33 = vector.load %arg8[%c0_17, %c0_18] : memref<4x1xf32, #tpu.memory_space<vmem>>, vector<4x1xf32>
    %cst_19 = arith.constant dense<0.000000e+00> : vector<4xf32>
    %34 = vector.multi_reduction <add>, %21, %cst_19 [1] : vector<4x256xf32> to vector<4xf32>
    %35 = vector.shape_cast %34 : vector<4xf32> to vector<4x1xf32>
    %36 = arith.addf %33, %35 : vector<4x1xf32>
    %c0_20 = arith.constant 0 : index
    %c0_21 = arith.constant 0 : index
    %37 = vector.load %arg8[%c0_20, %c0_21] : memref<4x1xf32, #tpu.memory_space<vmem>>, vector<4x1xf32>
    tpu.vector_store %arg8[%c0_20, %c0_21], %36 {strides = array<i32>} : memref<4x1xf32, #tpu.memory_space<vmem>>, vector<4x1xf32>,
    %c0_i32_22 = arith.constant 0 : i32
    %38 = arith.cmpi eq, %arg2, %c0_i32_22 : i32
    %39 = arith.extui %38 : i1 to i32
    %c0_i32_23 = arith.constant 0 : i32
    %40 = arith.cmpi ne, %39, %c0_i32_23 : i32
    scf.if %40 {
      %c0_24 = arith.constant 0 : index
      %c0_25 = arith.constant 0 : index
      %41 = vector.load %arg6[%c0_24, %c0_25] : memref<4x1xf32, #tpu.memory_space<vmem>>, vector<4x1xf32>
      %c0_26 = arith.constant 0 : index
      %c0_27 = arith.constant 0 : index
      %42 = vector.load %arg7[%c0_26, %c0_27] : memref<4x1xf32, #tpu.memory_space<vmem>>, vector<4x1xf32>
      %c0_28 = arith.constant 0 : index
      %c0_29 = arith.constant 0 : index
      %43 = vector.load %arg8[%c0_28, %c0_29] : memref<4x1xf32, #tpu.memory_space<vmem>>, vector<4x1xf32>
      %44 = tpu.concatenate %41, %42, %43 in 1 : vector<4x1xf32>, vector<4x1xf32>, vector<4x1xf32> -> vector<4x3xf32>
      %45 = vector.shape_cast %44 : vector<4x3xf32> to vector<1x1x4x3xf32>
      %c0_30 = arith.constant 0 : index
      %c0_31 = arith.constant 0 : index
      %c0_32 = arith.constant 0 : index
      %c0_33 = arith.constant 0 : index
      %46 = vector.load %arg5[%c0_30, %c0_31, %c0_32, %c0_33] : memref<1x1x4x3xf32, #tpu.memory_space<vmem>>, vector<1x1x4x3xf32>
      tpu.vector_store %arg5[%c0_30, %c0_31, %c0_32, %c0_33], %45 {strides = array<i32>} : memref<1x1x4x3xf32, #tpu.memory_space<vmem>>, vector<1x1x4x3xf32>,
    } else {
    }
    return
  }
  func.func @transform_0(%arg0: i32, %arg1: i32, %arg2: i32) -> (i32, i32, i32) {
    %c1_i32 = arith.constant 1 : i32
    %0 = arith.muli %arg1, %c1_i32 : i32
    %1 = arith.addi %0, %arg2 : i32
    %c0_i32 = arith.constant 0 : i32
    %c0_i32_0 = arith.constant 0 : i32
    return %arg0, %c0_i32, %1 : i32, i32, i32
  }
  func.func @transform_1(%arg0: i32, %arg1: i32, %arg2: i32) -> (i32, i32, i32) {
    %c1_i32 = arith.constant 1 : i32
    %0 = arith.muli %arg1, %c1_i32 : i32
    %1 = arith.addi %0, %arg2 : i32
    %c0_i32 = arith.constant 0 : i32
    %c0_i32_0 = arith.constant 0 : i32
    return %arg0, %c0_i32, %1 : i32, i32, i32
  }
  func.func @transform_2(%arg0: i32, %arg1: i32, %arg2: i32) -> (i32, i32, i32, i32) {
    %c0_i32 = arith.constant 0 : i32
    %c0_i32_0 = arith.constant 0 : i32
    %c0_i32_1 = arith.constant 0 : i32
    return %arg0, %arg1, %c0_i32, %c0_i32_0 : i32, i32, i32, i32
  }
}

</mosaic_0001>

<llo_original>
// kernel: tpu_custom_call.1
$region0: #{tpu_custom_call.1}
  #allocation0 [shape = 'u32[]', space=smem, size = 0x4, offset = 0x4, fixed_abs, tag = 'smem constant byte address 0x4 - core index']
  #allocation1 [shape = 'u32[144,128]{1,0:T(1,128)}', space=vmem, size = 0x12000, scoped, tag = 'internal scratch']
  #allocation2 [shape = 'f32[4,1]{1,0:T(4,128)}', space=vmem, size = 0x800, scoped, tag = 'scratch operand']
  #allocation3 [shape = 'f32[4,1]{1,0:T(4,128)}', space=vmem, size = 0x800, scoped, tag = 'scratch operand']
  #allocation4 [shape = 'f32[4,1]{1,0:T(4,128)}', space=vmem, size = 0x800, scoped, tag = 'scratch operand']
  %s0 = inlined_call_operand.hbm [shape: f32[2,4,256], index: 0, kind: input, shape index: {}]
  %s1 = inlined_call_operand.hbm [shape: s32[2,1,256], index: 1, kind: input, shape index: {}]
  %s2 = inlined_call_operand.vmem [shape: f32[2,1,4,3], index: 2, kind: output, shape index: {}]
  %s3 = sld [smem:[#allocation0]]
  $region57: #{tpu_custom_call.1} parent=0
    _
  %s5 = ssub.s32 1, %s3
  %s6 = scalar_select 0, %s5, %s3
  $region1: #{tpu_custom_call.1} parent=0
    #allocation5 [shape = 'u8[8192]{0}', space=vmem, size = 0x2000, scoped, tag = 'input window, operand 0']
    #allocation6 [shape = 's32[2]{0}', space=sflag, size = 0x8, scoped, tag = 'scoped memory for tpu_custom_call.1']
    #allocation7 [shape = 'u8[2048]{0}', space=vmem, size = 0x800, scoped, tag = 'input window, operand 1']
    #allocation8 [shape = 's32[2]{0}', space=sflag, size = 0x8, scoped, tag = 'scoped memory for tpu_custom_call.1']
    %7 = vsyncpa [#allocation6], 0
    %s8 = scalar_lea.sflag [#allocation6], 1
    %9 = vsyncpa %s8, 0
    %10 = vsyncpa [#allocation8], 0
    %s11 = scalar_lea.sflag [#allocation8], 1
    %12 = vsyncpa %s11, 0
    loop: start=0, step=1, limit=4
    $region2: #{tpu_custom_call.1} parent=1 // loop_pre_header
      _
    $region3: #{tpu_custom_call.1} parent=1 // loop_header
      %s14 = sphi 0, %s18
      %p15 = scmp.ge.s32.totalorder %s14, 4
      %s21 = sphi 0, %s40
      %s22 = sphi 0, %s36
      %s23 = sphi 0, %s32
      %s24 = sphi 0, %s21
      %s25 = sphi 0, %s22
      %s26 = sphi 0, %s23
      %s27 = sphi 0, %s24
      %s28 = sphi 0, %s25
      %s29 = sphi 0, %s26
      %s47 = sphi 0, %s49
      %s50 = sphi 0, %s47
      %s51 = sphi 0, %s50
      %s67 = sphi 0, %s51
      %s77 = sphi 0, %s79
      %s80 = sphi 0, %s77
      %s81 = sphi 0, %s80
      %s97 = sphi 0, %s81
      %s105 = sphi 0, %s107
      %s108 = sphi 0, %s105
      %s109 = sphi 0, %s108
      %s125 = sphi 0, %s109
    $region4: #{tpu_custom_call.1} parent=1 // loop_header_branch
      %17 = sbr.rel (%p15) target = $region8
    $region5: #{tpu_custom_call.1} parent=1 // loop_body
      %s19 = ssub.s32 %s14, 1
      %s20 = ssub.s32 %s14, 2
      %s30 = sadd.s32 1, %s23
      %p31 = scmp.ge.s32.totalorder %s30, 1
      %s32 = scalar_select %p31, 0, %s30
      %s33 = sadd.s32 1, %s22
      %s34 = scalar_select %p31, %s33, %s22
      %p35 = scmp.ge.s32.totalorder %s34, 1
      %s36 = scalar_select %p35, 0, %s34
      %s37 = sadd.s32 1, %s21
      %s38 = scalar_select %p35, %s37, %s21
      %p39 = scmp.ge.s32.totalorder %s38, 2
      %s40 = scalar_select %p39, 0, %s38
      %s41 = sadd.s32 %s22, %s23
      %s42 = sadd.s32 %s36, %s32
      %s43 = ssub.s32 %s21, %s40
      %s44 = ssub.s32 %s41, %s42
      %s45 = sor.u32 %s43, %s44
      %p46 = scmp.eq.s32.totalorder %s45, 0
      %s48 = sadd.s32 %s47, 1
      %s49 = scalar_select %p46, %s47, %s48
      %p52 = pneg %p46
      %p53 = scmp.eq.s32.totalorder %s14, 1
      %p54 = por %p52, %p53
      %p55 = scmp.ne.s32.totalorder %s47, %s50
      %p56 = scmp.eq.s32.totalorder %s14, 0
      %p57 = por %p55, %p56
      %p58 = scmp.ne.s32.totalorder %s47, %s50
      %p59 = scmp.eq.s32.totalorder %s19, 1
      %p60 = por %p58, %p59
      %p61 = scmp.ne.s32.totalorder %s50, %s51
      %p62 = scmp.eq.s32.totalorder %s19, 0
      %p63 = por %p61, %p62
      %p64 = scmp.ne.s32.totalorder %s50, %s51
      %p65 = scmp.eq.s32.totalorder %s20, 1
      %p66 = por %p64, %p65
      %p68 = scmp.ne.s32.totalorder %s51, %s67
      %p69 = scmp.eq.s32.totalorder %s20, 0
      %p70 = por %p68, %p69
      %s71 = sadd.s32 %s22, %s23
      %s72 = sadd.s32 %s36, %s32
      %s73 = ssub.s32 %s21, %s40
      %s74 = ssub.s32 %s71, %s72
      %s75 = sor.u32 %s73, %s74
      %p76 = scmp.eq.s32.totalorder %s75, 0
      %s78 = sadd.s32 %s77, 1
      %s79 = scalar_select %p76, %s77, %s78
      %p82 = pneg %p76
      %p83 = scmp.eq.s32.totalorder %s14, 1
      %p84 = por %p82, %p83
      %p85 = scmp.ne.s32.totalorder %s77, %s80
      %p86 = scmp.eq.s32.totalorder %s14, 0
      %p87 = por %p85, %p86
      %p88 = scmp.ne.s32.totalorder %s77, %s80
      %p89 = scmp.eq.s32.totalorder %s19, 1
      %p90 = por %p88, %p89
      %p91 = scmp.ne.s32.totalorder %s80, %s81
      %p92 = scmp.eq.s32.totalorder %s19, 0
      %p93 = por %p91, %p92
      %p94 = scmp.ne.s32.totalorder %s80, %s81
      %p95 = scmp.eq.s32.totalorder %s20, 1
      %p96 = por %p94, %p95
      %p98 = scmp.ne.s32.totalorder %s81, %s97
      %p99 = scmp.eq.s32.totalorder %s20, 0
      %p100 = por %p98, %p99
      %s101 = ssub.s32 %s21, %s40
      %s102 = ssub.s32 %s22, %s36
      %s103 = sor.u32 %s101, %s102
      %p104 = scmp.eq.s32.totalorder %s103, 0
      %s106 = sadd.s32 %s105, 1
      %s107 = scalar_select %p104, %s105, %s106
      %p110 = pneg %p104
      %p111 = scmp.eq.s32.totalorder %s14, 1
      %p112 = por %p110, %p111
      %p113 = scmp.ne.s32.totalorder %s105, %s108
      %p114 = scmp.eq.s32.totalorder %s14, 0
      %p115 = por %p113, %p114
      %p116 = scmp.ne.s32.totalorder %s105, %s108
      %p117 = scmp.eq.s32.totalorder %s19, 1
      %p118 = por %p116, %p117
      %p119 = scmp.ne.s32.totalorder %s108, %s109
      %p120 = scmp.eq.s32.totalorder %s19, 0
      %p121 = por %p119, %p120
      %p122 = scmp.ne.s32.totalorder %s108, %s109
      %p123 = scmp.eq.s32.totalorder %s20, 1
      %p124 = por %p122, %p123
      %p126 = scmp.ne.s32.totalorder %s109, %s125
      %p127 = scmp.eq.s32.totalorder %s20, 0
      %p128 = por %p126, %p127
      %p129 = scmp.le.s32.totalorder 1, %s14
      %p130 = scmp.lt.s32.totalorder %s14, 3
      %p131 = pnand %p129, %p130
      %p132 = pneg %p131
      // Predicated region
      $region9: #{tpu_custom_call.1} parent=5 // pred_check
        _
      $region10: #{tpu_custom_call.1} parent=5 // pred_check_branch
        %134 = sbr.rel (%p131) target = $region12
      $region11: #{tpu_custom_call.1} parent=5 // pred_region
        %s135 = ssub.s32 %s14, 1
      $region12: #{tpu_custom_call.1} parent=5 // pred_fallthru
        _
      %p136 = scmp.lt.s32.totalorder %s14, 2
      // Predicated region
      $region13: #{tpu_custom_call.1} parent=5 // pred_check
        %p137 = pneg %p136
      $region14: #{tpu_custom_call.1} parent=5 // pred_check_branch
        %139 = sbr.rel (%p137) target = $region16
      $region15: #{tpu_custom_call.1} parent=5 // pred_region
        // Predicated region
        $region17: #{tpu_custom_call.1} parent=15 // pred_check
          %p140 = pneg %p57
        $region18: #{tpu_custom_call.1} parent=15 // pred_check_branch
          %142 = sbr.rel (%p140) target = $region20
        $region19: #{tpu_custom_call.1} parent=15 // pred_region
          %s143 = sand.u32 %s47, 1
          %s144 = scalar_lea.sflag [#allocation6], %s143
          %s145 = sand.u32 %s47, 1
          %s146 = smul.addr %s145, 8
          %s147 = scalar_lea.vmem [#allocation5], %s146
          %s148 = sadd.s32 %s22, %s23
          %s149 = smul.u32 2, %s148
          %s151 = ssub.s32 128, 128
          %152 = vsyncadd %s144, %s151
          %s153 = smul.addr %s21, 2
          %s154 = sadd.s32 %s149, %s153
          %s155 = smul.addr %s154, 64
          %s156 = scalar_lea.hbm %s0, %s155
          %s158 = sshll.u32 %s147, 4
          %s159 = int_to_ptr.vmem [resolvable:$true] %s158
          %161 = dma.hbm_to_vmem [thread:$0]  %s156, 128, %s159, %s144
        $region20: #{tpu_custom_call.1} parent=15 // pred_fallthru
          _
        // Predicated region
        $region21: #{tpu_custom_call.1} parent=15 // pred_check
          %p162 = pneg %p87
        $region22: #{tpu_custom_call.1} parent=15 // pred_check_branch
          %164 = sbr.rel (%p162) target = $region24
        $region23: #{tpu_custom_call.1} parent=15 // pred_region
          %s165 = sand.u32 %s77, 1
          %s166 = scalar_lea.sflag [#allocation8], %s165
          %s167 = sand.u32 %s77, 1
          %s168 = smul.addr %s167, 2
          %s169 = scalar_lea.vmem [#allocation7], %s168
          %s170 = sadd.s32 %s22, %s23
          %s171 = smul.u32 2, %s170
          %s173 = ssub.s32 32, 32
          %174 = vsyncadd %s166, %s173
          %s175 = smul.addr %s21, 2
          %s176 = sadd.s32 %s171, %s175
          %s177 = smul.addr %s176, 16
          %s178 = scalar_lea.hbm %s1, %s177
          %s180 = sshll.u32 %s169, 4
          %s181 = int_to_ptr.vmem [resolvable:$true] %s180
          %183 = dma.hbm_to_vmem [thread:$0]  %s178, 32, %s181, %s166
        $region24: #{tpu_custom_call.1} parent=15 // pred_fallthru
          _
      $region16: #{tpu_custom_call.1} parent=5 // pred_fallthru
        _
      %p184 = scmp.le.s32.totalorder 1, %s14
      %p185 = scmp.lt.s32.totalorder %s14, 3
      %p186 = pnand %p184, %p185
      %p187 = pneg %p186
      // Predicated region
      $region25: #{tpu_custom_call.1} parent=5 // pred_check
        _
      $region26: #{tpu_custom_call.1} parent=5 // pred_check_branch
        %189 = sbr.rel (%p186) target = $region28
      $region27: #{tpu_custom_call.1} parent=5 // pred_region
        %s190 = ssub.s32 %s14, 1
        %s191 = sand.u32 %s50, 1
        %s192 = scalar_lea.sflag [#allocation6], %s191
        %s193 = sand.u32 %s50, 1
        %s194 = smul.addr %s193, 8
        %s195 = scalar_lea.vmem [#allocation5], %s194
        // Predicated region
        $region29: #{tpu_custom_call.1} parent=27 // pred_check
          %p196 = pneg %p63
        $region30: #{tpu_custom_call.1} parent=27 // pred_check_branch
          %198 = sbr.rel (%p196) target = $region32
        $region31: #{tpu_custom_call.1} parent=27 // pred_region
          %199 = dma.done %s192, 128
        $region32: #{tpu_custom_call.1} parent=27 // pred_fallthru
          _
        %s200 = sand.u32 %s80, 1
        %s201 = scalar_lea.sflag [#allocation8], %s200
        %s202 = sand.u32 %s80, 1
        %s203 = smul.addr %s202, 2
        %s204 = scalar_lea.vmem [#allocation7], %s203
        // Predicated region
        $region33: #{tpu_custom_call.1} parent=27 // pred_check
          %p205 = pneg %p93
        $region34: #{tpu_custom_call.1} parent=27 // pred_check_branch
          %207 = sbr.rel (%p205) target = $region36
        $region35: #{tpu_custom_call.1} parent=27 // pred_region
          %208 = dma.done %s201, 32
        $region36: #{tpu_custom_call.1} parent=27 // pred_fallthru
          _
        %s209 = sand.u32 %s50, 1
        %s210 = scalar_lea.sflag [#allocation6], %s209
        %s211 = sand.u32 %s50, 1
        %s212 = smul.addr %s211, 8
        %s213 = scalar_lea.vmem [#allocation5], %s212
        %p214 = pneg %p63
        %p215 = pneg %p60
        %s216 = sand.u32 %s80, 1
        %s217 = scalar_lea.sflag [#allocation8], %s216
        %s218 = sand.u32 %s80, 1
        %s219 = smul.addr %s218, 2
        %s220 = scalar_lea.vmem [#allocation7], %s219
        %p221 = pneg %p93
        %p222 = pneg %p90
        %p223 = pneg %p121
        %p224 = pneg %p118
        %p225 = scmp.lt.s32.totalorder %s24, 1
        %s226 = scalar_select %p225, %s24, 1
        %p227 = scmp.lt.s32.totalorder %s25, 0
        %s228 = scalar_select %p227, %s25, 0
        %s229 = sadd.s32 %s228, %s226
        %s230 = smul.addr %s229, 4
        %s231 = scalar_lea.vmem %s2, %s230
        %s232 = sadd.s32 %s25, %s26
        %s233 = smul.u32 2, %s232
        %s234 = sadd.s32 %s25, %s26
        %s235 = smul.u32 2, %s234
        %p236 = scmp.lt.s32.totalorder %s24, 1
        %s237 = scalar_select %p236, %s24, 1
        %p238 = scmp.lt.s32.totalorder %s25, 0
        %s239 = scalar_select %p238, %s25, 0
        %s240 = sadd.s32 %s239, %s237
        %s241 = smul.addr %s240, 4
        %s242 = scalar_lea.vmem %s2, %s241
        %p243 = scmp.eq.s32.totalorder %s26, 0
        // Predicated region
        $region37: #{tpu_custom_call.1} parent=27 // pred_check
          %p244 = pneg %p243
        $region38: #{tpu_custom_call.1} parent=27 // pred_check_branch
          %246 = sbr.rel (%p244) target = $region40
        $region39: #{tpu_custom_call.1} parent=27 // pred_region
          %vm247 = vcmask 3072
          %248 = vst.msk [vmem:[#allocation2] sm:$0xf] %vm247, 0.0
          %249 = vst.msk [vmem:[#allocation3] sm:$0xf] %vm247, 0.0
          %250 = vst.msk [vmem:[#allocation4] sm:$0xf] %vm247, 0.0
        $region40: #{tpu_custom_call.1} parent=27 // pred_fallthru
          _
        %v251 = vld [vmem:[%s195] sm:$0xff]
        %v253 = vcombine.high %v251, %v251
        %vm255 = vcmask 1043456
        %v256 = vsel %vm255, %v251, -inf
        %v257 = vrot.slane %v256, 4
        %v258 = vmax.f32 %v256, %v257
        %v259 = vrot.slane %v258, 2
        %v260 = vmax.f32 %v258, %v259
        %v261 = vrot.slane %v260, 1
        %v262 = vmax.f32 %v260, %v261
        %v263 = vsel %vm255, %v253, -inf
        %v264 = vrot.slane %v263, 4
        %v265 = vmax.f32 %v263, %v264
        %v266 = vrot.slane %v265, 2
        %v267 = vmax.f32 %v265, %v266
        %v268 = vrot.slane %v267, 1
        %v269 = vmax.f32 %v267, %v268
        %v272 = vcombine.low %v262, %v269
        %v274 = vsub.f32 %v251, %v272
        %v275 = vmul.f32 %v274, 1.442695
        %v276 = vpow.pop %v275
        %v278 = vcombine.high %v276, %v276
        %v280 = vsel %vm255, %v276, 0.0
        %v281 = vrot.slane %v280, 4
        %v282 = vadd.f32 %v280, %v281
        %v283 = vrot.slane %v282, 2
        %v284 = vadd.f32 %v282, %v283
        %v285 = vrot.slane %v284, 1
        %v286 = vadd.f32 %v284, %v285
        %v287 = vsel %vm255, %v278, 0.0
        %v288 = vrot.slane %v287, 4
        %v289 = vadd.f32 %v287, %v288
        %v290 = vrot.slane %v289, 2
        %v291 = vadd.f32 %v289, %v290
        %v292 = vrot.slane %v291, 1
        %v293 = vadd.f32 %v291, %v292
        %v294 = vrcp.pop %v286
        %v295 = vrcp.pop %v293
        %v298 = vcombine.low %v294, %v295
        %v300 = vmul.f32 %v276, %v298
        %v301 = vld [vmem:[%s204] sm:$0x3]
        %v302 = vlaneseq
        %v303 = vshrl.u32 %v302, 7
        %v304 = vlaneseq
        %v305 = vshrl.u32 %v304, 7
        %v306 = vsub.s32 0, %v305
        %v307 = vrot.slane %v301, %v306
        %v308 = vlaneseq
        %v309 = vshrl.u32 %v308, 7
        %v310 = vsub.s32 1, %v309
        %v311 = vrot.slane %v301, %v310
        %vm312 = vcmp.eq.s32.totalorder %v307, %v303
        %vm313 = vcmp.eq.s32.totalorder %v311, %v303
        %v314 = vsel %vm312, 1, 0
        %v315 = vsel %vm313, 1, 0
        %v316 = vcvt.s32.f32 %v314
        %v317 = vcvt.s32.f32 %v315
        %v318 = vld [vmem:[#allocation2] sm:$0xf]
        %v321 = vcombine.low %v316, %v317
        %v323 = vmul.f32 %v300, %v321
        %v325 = vcombine.high %v323, %v323
        %v327 = vsel %vm255, %v323, 0.0
        %v328 = vsel %vm255, %v325, 0.0
        %v329 = vadd.f32 %v327, %v328
        %330 = vadd.xlane.f32.xlu0 %v329
        %v331 = vpop.xlane.xlu0 %330
        %v332 = vadd.f32 %v318, %v331
        %vm333 = vcmask 3072
        %334 = vst.msk [vmem:[#allocation2] sm:$0xf] %vm333, %v332
        %v335 = vld [vmem:[#allocation3] sm:$0xf]
        %v337 = vcombine.high %v300, %v300
        %v339 = vsel %vm255, %v300, 0.0
        %v340 = vsel %vm255, %v337, 0.0
        %v341 = vadd.f32 %v339, %v340
        %342 = vadd.xlane.f32.xlu0 %v341
        %v343 = vpop.xlane.xlu0 %342
        %v344 = vadd.f32 %v335, %v343
        %345 = vst.msk [vmem:[#allocation3] sm:$0xf] %vm333, %v344
        %v346 = vld [vmem:[#allocation4] sm:$0xf]
        %v347 = vsel %vm255, %v316, 0.0
        %v348 = vsel %vm255, %v317, 0.0
        %v349 = vadd.f32 %v347, %v348
        %350 = vadd.xlane.f32.xlu0 %v349
        %v351 = vpop.xlane.xlu0 %350
        %v352 = vadd.f32 %v346, %v351
        %353 = vst.msk [vmem:[#allocation4] sm:$0xf] %vm333, %v352
        // Predicated region
        $region41: #{tpu_custom_call.1} parent=27 // pred_check
          %p354 = pneg %p243
        $region42: #{tpu_custom_call.1} parent=27 // pred_check_branch
          %356 = sbr.rel (%p354) target = $region44
        $region43: #{tpu_custom_call.1} parent=27 // pred_region
          %v357 = vld [vmem:[#allocation2] sm:$0xf]
          %v358 = vld [vmem:[#allocation3] sm:$0xf]
          %v359 = vld [vmem:[#allocation4] sm:$0xf]
          %361 = vrot.lane.b32.xlu0 %v358, 1
          %v362 = vpop.permute.xlu0 %361
          %365 = vrot.lane.b32.xlu0 %v359, 2
          %v366 = vpop.permute.xlu0 %365
          %vm368 = vcmask 7168
          %v369 = vsel %vm368, %v357, %v362
          %vm370 = vcmask 15360
          %v371 = vsel %vm370, %v369, %v366
          %vm372 = vcmask 19456
          %373 = vst.msk [vmem:[%s242] sm:$0xf] %vm372, %v371
        $region44: #{tpu_custom_call.1} parent=27 // pred_fallthru
          _
        %p374 = scmp.lt.s32.totalorder %s24, 1
        %s375 = scalar_select %p374, %s24, 1
        %p376 = scmp.lt.s32.totalorder %s25, 0
        %s377 = scalar_select %p376, %s25, 0
        %s378 = sadd.s32 %s377, %s375
        %s379 = smul.addr %s378, 4
        %s380 = scalar_lea.vmem %s2, %s379
        // Predicated region
        $region45: #{tpu_custom_call.1} parent=27 // pred_check
          %p381 = pneg %p118
        $region46: #{tpu_custom_call.1} parent=27 // pred_check_branch
          %383 = sbr.rel (%p381) target = $region48
        $region47: #{tpu_custom_call.1} parent=27 // pred_region
          _
        $region48: #{tpu_custom_call.1} parent=27 // pred_fallthru
          _
      $region28: #{tpu_custom_call.1} parent=5 // pred_fallthru
        _
      %p384 = scmp.le.s32.totalorder 2, %s14
      // Predicated region
      $region49: #{tpu_custom_call.1} parent=5 // pred_check
        %p385 = pneg %p384
      $region50: #{tpu_custom_call.1} parent=5 // pred_check_branch
        %387 = sbr.rel (%p385) target = $region52
      $region51: #{tpu_custom_call.1} parent=5 // pred_region
        %s388 = ssub.s32 %s14, 2
        // Predicated region
        $region53: #{tpu_custom_call.1} parent=51 // pred_check
          %p389 = pneg %p124
        $region54: #{tpu_custom_call.1} parent=51 // pred_check_branch
          %391 = sbr.rel (%p389) target = $region56
        $region55: #{tpu_custom_call.1} parent=51 // pred_region
          %p392 = scmp.lt.s32.totalorder %s27, 1
          %s393 = scalar_select %p392, %s27, 1
          %p394 = scmp.lt.s32.totalorder %s28, 0
          %s395 = scalar_select %p394, %s28, 0
          %s396 = sadd.s32 %s395, %s393
          %s397 = smul.addr %s396, 4
          %s398 = scalar_lea.vmem %s2, %s397
        $region56: #{tpu_custom_call.1} parent=51 // pred_fallthru
          _
      $region52: #{tpu_custom_call.1} parent=5 // pred_fallthru
        _
    $region6: #{tpu_custom_call.1} parent=1 // loop_footer
      %s18 = sadd.s32 1, %s14
    $region7: #{tpu_custom_call.1} parent=1 // loop_footer_branch
      %13 = sbr.rel target = $region3
    $region8: #{tpu_custom_call.1} parent=1 // loop_exit
      _
    %399 = vsyncpa [#allocation6], 1
    %s400 = scalar_lea.sflag [#allocation6], 1
    %401 = vsyncpa %s400, 1
    %402 = vsyncpa [#allocation8], 1
    %s403 = scalar_lea.sflag [#allocation8], 1
    %404 = vsyncpa %s403, 1

</llo_original>
